<compile_context>
chip_gen: v7x
topology: tpu7x:2x2x1
jax: 0.10.0
libtpu: 0.0.40
codegen_flags: <defaults>
</compile_context>

<pallas_src>
import functools
import math

import jax
import jax.numpy as jnp
import numpy as np
from jax.experimental import pallas as pl
from jax.experimental.pallas import tpu as pltpu


def _mlp_kernel_bias(x_ref, w_ref, p_ref, m_ref, b_ref, o_ref):
    # x_ref: (tB, G*Din)   w_ref: (G*Din, Dout)
    # p_ref: (Dout, G*Dout)  P[o, c] = (c % Dout == o)   -> lane replication
    # m_ref: (G*Din, G*Dout) M[r, c] = (r//Din == c//Dout) -> block-diag mask
    # b_ref: (1, G*Dout)   o_ref: (tB, G*Dout)
    tiled = jnp.dot(w_ref[...], p_ref[...], preferred_element_type=jnp.float32)
    w_bd = (tiled * m_ref[...].astype(jnp.float32)).astype(x_ref.dtype)
    y = jnp.dot(x_ref[...], w_bd, preferred_element_type=jnp.float32)
    y = y + b_ref[...].astype(jnp.float32)        # f32 epilogue
    o_ref[...] = y.astype(o_ref.dtype)            # downcast only at store


def _mlp_kernel_nobias(x_ref, w_ref, p_ref, m_ref, o_ref):
    tiled = jnp.dot(w_ref[...], p_ref[...], preferred_element_type=jnp.float32)
    w_bd = (tiled * m_ref[...].astype(jnp.float32)).astype(x_ref.dtype)
    y = jnp.dot(x_ref[...], w_bd, preferred_element_type=jnp.float32)
    o_ref[...] = y.astype(o_ref.dtype)


def multilinear_parallel(x, weight, bias, size):
    """JAX/Pallas equivalent of MultiLinearParallel.forward.

    x:      (*batch, *size, dim_in)
    weight: (*size, dim_in, dim_out)
    bias:   (*size, dim_out) or None
    returns (*batch, *size, dim_out)
    """
    size = tuple(size)
    n_size = len(size)
    dim_in, dim_out = weight.shape[-2], weight.shape[-1]
    G = math.prod(size) if size else 1
    GDin, GDout = G * dim_in, G * dim_out

    batch_shape = x.shape[: x.ndim - n_size - 1]
    B = math.prod(batch_shape) if batch_shape else 1

    # Trailing-dim reshapes only (row-major flattening; no HBM transposes).
    x2d = x.reshape(B, GDin)
    w2 = weight.reshape(GDin, dim_out)
    b2d = None if bias is None else bias.reshape(1, GDout)

    # Compile-time constants (baked into the program by jit; no runtime
    # wrapper-side compute):
    #   P[o, c] = (c % Dout == o)           lane-replication selection matrix
    #   M[r, c] = (r // Din == c // Dout)   block-diagonal mask
    p_const = jnp.asarray(
        np.tile(np.eye(dim_out, dtype=np.float32), (1, G)), dtype=weight.dtype
    )
    m_const = jnp.asarray(
        np.kron(np.eye(G, dtype=np.float32),
                np.ones((dim_in, dim_out), dtype=np.float32)),
        dtype=weight.dtype,
    )

    # Single grid step for the intended small regime; tile B (multiple of 8)
    # when large so the grid axis shards across TensorCores and VMEM stays
    # comfortably double-buffered (v7x: 64 MiB).
    tB = B if B <= 512 else 512
    grid = (pl.cdiv(B, tB),)

    in_specs = [
        pl.BlockSpec((tB, GDin), lambda i: (i, 0)),
        pl.BlockSpec((GDin, dim_out), lambda i: (0, 0)),   # grid-resident
        pl.BlockSpec((dim_out, GDout), lambda i: (0, 0)),  # grid-resident
        pl.BlockSpec((GDin, GDout), lambda i: (0, 0)),     # grid-resident
    ]
    args = [x2d, w2, p_const, m_const]
    kernel = _mlp_kernel_nobias
    if b2d is not None:
        in_specs.append(pl.BlockSpec((1, GDout), lambda i: (0, 0)))
        args.append(b2d)
        kernel = _mlp_kernel_bias

    y2d = pl.pallas_call(
        kernel,
        out_shape=jax.ShapeDtypeStruct((B, GDout), x.dtype),
        grid_spec=pltpu.PrefetchScalarGridSpec(
            num_scalar_prefetch=0,
            grid=grid,
            in_specs=in_specs,
            out_specs=pl.BlockSpec((tB, GDout), lambda i: (i, 0)),
        ),
        compiler_params=pltpu.CompilerParams(
            dimension_semantics=("parallel",),
        ),
    )(*args)

    return y2d.reshape(*batch_shape, *size, dim_out)


def _reference(x, weight, bias, size):
    size = tuple(size)
    dim_in, dim_out = weight.shape[-2], weight.shape[-1]
    G = math.prod(size)
    batch_shape = x.shape[: x.ndim - len(size) - 1]
    B = math.prod(batch_shape) if batch_shape else 1
    x_r = x.reshape(B, G, dim_in)
    w_r = weight.reshape(G, dim_in, dim_out)
    y = jnp.einsum("bgi,gio->bgo", x_r, w_r,
                   precision=jax.lax.Precision.HIGHEST)
    if bias is not None:
        y = y + bias.reshape(G, dim_out)[None]
    return y.reshape(*batch_shape, *size, dim_out)


if __name__ == "__main__":
    key = jax.random.PRNGKey(0)
    kx, kw, kb, kx2 = jax.random.split(key, 4)

    # Shapes consistent with the module: dim_in * dim_out * prod(size) = 768
    # <= 1024, the regime where MultiLinear.auto picks the Parallel variant.
    size = (2, 3)
    dim_in, dim_out = 8, 16
    batch = 4

    x = jax.random.normal(kx, (batch, *size, dim_in), dtype=jnp.float32)
    weight = jax.random.normal(kw, (*size, dim_in, dim_out), dtype=jnp.float32) * 0.1
    bias = jax.random.normal(kb, (*size, dim_out), dtype=jnp.float32) * 0.1

    fwd = jax.jit(functools.partial(multilinear_parallel, size=size))
    y = fwd(x, weight, bias)
    jax.block_until_ready(y)
    y_ref = _reference(x, weight, bias, size)
    assert y.shape == (batch, *size, dim_out), y.shape
    assert jnp.allclose(y, y_ref, atol=1e-5, rtol=1e-5), float(
        jnp.max(jnp.abs(y - y_ref)))

    # No-bias path exercises the dedicated kernel (no zeros array via HBM).
    fwd_nb = jax.jit(functools.partial(multilinear_parallel, bias=None, size=size))
    y_nb = fwd_nb(x, weight)
    jax.block_until_ready(y_nb)
    y_nb_ref = _reference(x, weight, None, size)
    assert jnp.allclose(y_nb, y_nb_ref, atol=1e-5, rtol=1e-5), float(
        jnp.max(jnp.abs(y_nb - y_nb_ref)))

    # Multi-axis batch exercises the leading-dim flatten / unflatten.
    x_mb = jax.random.normal(kx2, (3, 5, *size, dim_in), dtype=jnp.float32)
    y_mb = jax.jit(functools.partial(multilinear_parallel, size=size))(
        x_mb, weight, bias)
    jax.block_until_ready(y_mb)
    y_mb_ref = _reference(x_mb, weight, bias, size)
    assert y_mb.shape == (3, 5, *size, dim_out), y_mb.shape
    assert jnp.allclose(y_mb, y_mb_ref, atol=1e-5, rtol=1e-5), float(
        jnp.max(jnp.abs(y_mb - y_mb_ref)))

    print("KERNEL_OK")
</pallas_src>

<mosaic_0001>
module attributes {stable_mosaic.version = 11 : i64} {
  func.func @_mlp_kernel_bias(%arg0: i32, %arg1: memref<4x48xf32, #tpu.memory_space<vmem>>, %arg2: memref<48x16xf32, #tpu.memory_space<vmem>>, %arg3: memref<16x96xf32, #tpu.memory_space<vmem>>, %arg4: memref<48x96xf32, #tpu.memory_space<vmem>>, %arg5: memref<1x96xf32, #tpu.memory_space<vmem>>, %arg6: memref<4x96xf32, #tpu.memory_space<vmem>>) attributes {dimension_semantics = [#tpu.dimension_semantics<parallel>], iteration_bounds = array<i64: 1>, scalar_prefetch = 0 : i64, scratch_operands = 0 : i64, tpu.core_type = #tpu.core_type<tc>, window_params = [{transform_indices = @transform_0, window_bounds = array<i64: 4, 48>}, {pipeline_mode = #tpu.pipeline_mode<synchronous>, transform_indices = @transform_1, window_bounds = array<i64: 48, 16>}, {pipeline_mode = #tpu.pipeline_mode<synchronous>, transform_indices = @transform_2, window_bounds = array<i64: 16, 96>}, {pipeline_mode = #tpu.pipeline_mode<synchronous>, transform_indices = @transform_3, window_bounds = array<i64: 48, 96>}, {pipeline_mode = #tpu.pipeline_mode<synchronous>, transform_indices = @transform_4, window_bounds = array<i64: 1, 96>}, {transform_indices = @transform_5, window_bounds = array<i64: 4, 96>}]} {
    %c0 = arith.constant 0 : index
    %c0_0 = arith.constant 0 : index
    %0 = vector.load %arg2[%c0, %c0_0] : memref<48x16xf32, #tpu.memory_space<vmem>>, vector<48x16xf32>
    %c0_1 = arith.constant 0 : index
    %c0_2 = arith.constant 0 : index
    %1 = vector.load %arg3[%c0_1, %c0_2] : memref<16x96xf32, #tpu.memory_space<vmem>>, vector<16x96xf32>
    %cst = arith.constant dense<0.000000e+00> : vector<48x96xf32>
    %2 = tpu.matmul %0, %1, %cst {dimension_numbers = #tpu.dot_dimension_numbers<[1], [0], [0], [1], [0, 0, 1, 1], [], []>} : vector<48x16xf32>, vector<16x96xf32>, vector<48x96xf32> -> vector<48x96xf32>
    %c0_3 = arith.constant 0 : index
    %c0_4 = arith.constant 0 : index
    %3 = vector.load %arg4[%c0_3, %c0_4] : memref<48x96xf32, #tpu.memory_space<vmem>>, vector<48x96xf32>
    %4 = arith.mulf %2, %3 : vector<48x96xf32>
    %c0_5 = arith.constant 0 : index
    %c0_6 = arith.constant 0 : index
    %5 = vector.load %arg1[%c0_5, %c0_6] : memref<4x48xf32, #tpu.memory_space<vmem>>, vector<4x48xf32>
    %cst_7 = arith.constant dense<0.000000e+00> : vector<4x96xf32>
    %6 = tpu.matmul %5, %4, %cst_7 {dimension_numbers = #tpu.dot_dimension_numbers<[1], [0], [0], [1], [0, 0, 1, 1], [], []>} : vector<4x48xf32>, vector<48x96xf32>, vector<4x96xf32> -> vector<4x96xf32>
    %c0_8 = arith.constant 0 : index
    %c0_9 = arith.constant 0 : index
    %7 = vector.load %arg5[%c0_8, %c0_9] : memref<1x96xf32, #tpu.memory_space<vmem>>, vector<1x96xf32>
    %8 = vector.broadcast %7 : vector<1x96xf32> to vector<4x96xf32>
    %9 = arith.addf %6, %8 : vector<4x96xf32>
    %c0_10 = arith.constant 0 : index
    %c0_11 = arith.constant 0 : index
    %10 = vector.load %arg6[%c0_10, %c0_11] : memref<4x96xf32, #tpu.memory_space<vmem>>, vector<4x96xf32>
    tpu.vector_store %arg6[%c0_10, %c0_11], %9 {strides = array<i32>} : memref<4x96xf32, #tpu.memory_space<vmem>>, vector<4x96xf32>,
    return
  }
  func.func @transform_0(%arg0: i32) -> (i32, i32) {
    %c0_i32 = arith.constant 0 : i32
    %c0_i32_0 = arith.constant 0 : i32
    return %arg0, %c0_i32 : i32, i32
  }
  func.func @transform_1(%arg0: i32) -> (i32, i32) {
    %c0_i32 = arith.constant 0 : i32
    %c0_i32_0 = arith.constant 0 : i32
    %c0_i32_1 = arith.constant 0 : i32
    return %c0_i32, %c0_i32_0 : i32, i32
  }
  func.func @transform_2(%arg0: i32) -> (i32, i32) {
    %c0_i32 = arith.constant 0 : i32
    %c0_i32_0 = arith.constant 0 : i32
    %c0_i32_1 = arith.constant 0 : i32
    return %c0_i32, %c0_i32_0 : i32, i32
  }
  func.func @transform_3(%arg0: i32) -> (i32, i32) {
    %c0_i32 = arith.constant 0 : i32
    %c0_i32_0 = arith.constant 0 : i32
    %c0_i32_1 = arith.constant 0 : i32
    return %c0_i32, %c0_i32_0 : i32, i32
  }
  func.func @transform_4(%arg0: i32) -> (i32, i32) {
    %c0_i32 = arith.constant 0 : i32
    %c0_i32_0 = arith.constant 0 : i32
    %c0_i32_1 = arith.constant 0 : i32
    return %c0_i32, %c0_i32_0 : i32, i32
  }
  func.func @transform_5(%arg0: i32) -> (i32, i32) {
    %c0_i32 = arith.constant 0 : i32
    %c0_i32_0 = arith.constant 0 : i32
    return %arg0, %c0_i32 : i32, i32
  }
}

</mosaic_0001>

<llo_original>
// kernel: multilinear_parallel.1
$region0: #{multilinear_parallel.1}
  #allocation0 [shape = 'u32[]', space=smem, size = 0x4, offset = 0x4, fixed_abs, tag = 'smem constant byte address 0x4 - core index']
  #allocation1 [shape = 'u32[144,128]{1,0:T(1,128)}', space=vmem, size = 0x12000, scoped, tag = 'internal scratch']
  %s0 = inlined_call_operand.vmem [shape: f32[4,48], index: 0, kind: input, shape index: {}]
  %s1 = inlined_call_operand.vmem [shape: f32[48,16], index: 1, kind: input, shape index: {}]
  %s2 = inlined_call_operand.vmem [shape: f32[16,96], index: 2, kind: input, shape index: {}]
  %s3 = inlined_call_operand.vmem [shape: f32[48,96], index: 3, kind: input, shape index: {}]
  %s4 = inlined_call_operand.vmem [shape: f32[1,96], index: 4, kind: input, shape index: {}]
  %s5 = inlined_call_operand.vmem [shape: f32[4,96], index: 5, kind: output, shape index: {}]
  %s6 = sld [smem:[#allocation0]]
  $region30: #{multilinear_parallel.1} parent=0
    _
  %s8 = ssub.s32 1, %s6
  %s9 = scalar_select 0, %s8, %s6
  // Predicated region
  $region2: #{multilinear_parallel.1} parent=0 // pred_check
    _
  $region3: #{multilinear_parallel.1} parent=0 // pred_check_branch
    %11 = sbr.rel (0) target = $region5
  $region4: #{multilinear_parallel.1} parent=0 // pred_region
    _
  $region5: #{multilinear_parallel.1} parent=0 // pred_fallthru
    _
  // Predicated region
  $region6: #{multilinear_parallel.1} parent=0 // pred_check
    _
  $region7: #{multilinear_parallel.1} parent=0 // pred_check_branch
    %13 = sbr.rel (0) target = $region9
  $region8: #{multilinear_parallel.1} parent=0 // pred_region
    _
  $region9: #{multilinear_parallel.1} parent=0 // pred_fallthru
    _
  // Predicated region
  $region10: #{multilinear_parallel.1} parent=0 // pred_check
    _
  $region11: #{multilinear_parallel.1} parent=0 // pred_check_branch
    %15 = sbr.rel (0) target = $region13
  $region12: #{multilinear_parallel.1} parent=0 // pred_region
    _
  $region13: #{multilinear_parallel.1} parent=0 // pred_fallthru
    _
  // Predicated region
  $region14: #{multilinear_parallel.1} parent=0 // pred_check
    _
  $region15: #{multilinear_parallel.1} parent=0 // pred_check_branch
    %17 = sbr.rel (0) target = $region17
  $region16: #{multilinear_parallel.1} parent=0 // pred_region
    _
  $region17: #{multilinear_parallel.1} parent=0 // pred_fallthru
    _
  // Predicated region
  $region18: #{multilinear_parallel.1} parent=0 // pred_check
    _
  $region19: #{multilinear_parallel.1} parent=0 // pred_check_branch
    %19 = sbr.rel (0) target = $region21
  $region20: #{multilinear_parallel.1} parent=0 // pred_region
    _
  $region21: #{multilinear_parallel.1} parent=0 // pred_fallthru
    _
  %v20 = vld [vmem:[%s1] sm:$0xff]
  %v21 = vld [vmem:[%s1 + $0x8] sm:$0xff]
  %v22 = vld [vmem:[%s1 + $0x10] sm:$0xff]
  %v23 = vld [vmem:[%s1 + $0x18] sm:$0xff]
  %v24 = vld [vmem:[%s1 + $0x20] sm:$0xff]
  %v25 = vld [vmem:[%s1 + $0x28] sm:$0xff]
  %v26 = vld [vmem:[%s2] sm:$0xff]
  %v27 = vld [vmem:[%s2 + $0x8] sm:$0xff]
  %vm28 = vcmask 130048
  %v30 = vsel %vm28, %v20, 0
  %v33 = vsel %vm28, %v21, 0
  %v36 = vsel %vm28, %v22, 0
  %v39 = vsel %vm28, %v23, 0
  %v42 = vsel %vm28, %v24, 0
  %v45 = vsel %vm28, %v25, 0
  %47 = vmatprep.subr.mxu0 0.0
  %48 = vmatpush1.msra.mxu0 %v26
  %49 = vmatprep.subr.mxu0 0.0
  %50 = vmatpush1.msra.mxu0 %v27
  %51 = vmatprep.subr.mxu0 0.0
  %52 = vmatpush1.msra.mxu0 0.0
  %53 = vmatprep.subr.mxu0 0.0
  %54 = vmatpush1.msra.mxu0 0.0
  %55 = vmatprep.subr.mxu0 0.0
  %56 = vmatpush1.msra.mxu0 0.0
  %57 = vmatprep.subr.mxu0 0.0
  %58 = vmatpush1.msra.mxu0 0.0
  %59 = vmatprep.subr.mxu0 0.0
  %60 = vmatpush1.msra.mxu0 0.0
  %61 = vmatprep.subr.mxu0 0.0
  %62 = vmatpush1.msra.mxu0 0.0
  %63 = vmatprep.subr.mxu0 0.0
  %64 = vmatpush1.msra.mxu0 0.0
  %65 = vmatprep.subr.mxu0 0.0
  %66 = vmatpush1.msra.mxu0 0.0
  %67 = vmatprep.subr.mxu0 0.0
  %68 = vmatpush1.msra.mxu0 0.0
  %69 = vmatprep.subr.mxu0 0.0
  %70 = vmatpush1.msra.mxu0 0.0
  %71 = vmatprep.subr.mxu0 0.0
  %72 = vmatpush1.msra.mxu0 0.0
  %73 = vmatprep.subr.mxu0 0.0
  %74 = vmatpush1.msra.mxu0 0.0
  %75 = vmatprep.subr.mxu0 0.0
  %76 = vmatpush1.msra.mxu0 0.0
  %77 = vmatprep.subr.mxu0 0.0
  %78 = vmatpush1.msra.mxu0 0.0
  %79 = vmatprep.subr.mxu0 0.0
  %80 = vmatpush1.msra.mxu0 0.0
  %81 = vmatprep.subr.mxu0 0.0
  %82 = vmatpush1.msra.mxu0 0.0
  %83 = vmatprep.subr.mxu0 0.0
  %84 = vmatpush1.msra.mxu0 0.0
  %85 = vmatprep.subr.mxu0 0.0
  %86 = vmatpush1.msra.mxu0 0.0
  %87 = vmatprep.subr.mxu0 0.0
  %88 = vmatpush1.msra.mxu0 0.0
  %89 = vmatprep.subr.mxu0 0.0
  %90 = vmatpush1.msra.mxu0 0.0
  %91 = vmatprep.subr.mxu0 0.0
  %92 = vmatpush1.msra.mxu0 0.0
  %93 = vmatprep.subr.mxu0 0.0
  %94 = vmatpush1.msra.mxu0 0.0
  %95 = vmatprep.subr.mxu0 0.0
  %96 = vmatpush1.msra.mxu0 0.0
  %97 = vmatprep.subr.mxu0 0.0
  %98 = vmatpush1.msra.mxu0 0.0
  %99 = vmatprep.subr.mxu0 0.0
  %100 = vmatpush1.msra.mxu0 0.0
  %101 = vmatprep.subr.mxu0 0.0
  %102 = vmatpush1.msra.mxu0 0.0
  %103 = vmatprep.subr.mxu0 0.0
  %104 = vmatpush1.msra.mxu0 0.0
  %105 = vmatprep.subr.mxu0 0.0
  %106 = vmatpush1.msra.mxu0 0.0
  %107 = vmatprep.subr.mxu0 0.0
  %108 = vmatpush1.msra.mxu0 0.0
  %109 = vmatprep.subr.mxu0 0.0
  %110 = vmatpush1.msra.mxu0 0.0
  %111 = vmatprep.mubr.f32.mxu0 0.0
  %112 = vmatmul.mubr.f32.gmra.mrb[0].mxu0 %v30
  %v113 = vpop.f32.mrb[0].mxu0
  %v114 = vadd.f32 0.0, %v113
  %v115 = vpop.f32.mrb[0].mxu0
  %116 = vmatprep.mubr.f32.mxu0 0.0
  %117 = vmatmul.mubr.f32.gmra.mrb[0].mxu0 %v33
  %v118 = vpop.f32.mrb[0].mxu0
  %v119 = vadd.f32 0.0, %v118
  %v120 = vpop.f32.mrb[0].mxu0
  %121 = vmatprep.mubr.f32.mxu0 0.0
  %122 = vmatmul.mubr.f32.gmra.mrb[0].mxu0 %v36
  %v123 = vpop.f32.mrb[0].mxu0
  %v124 = vadd.f32 0.0, %v123
  %v125 = vpop.f32.mrb[0].mxu0
  %126 = vmatprep.mubr.f32.mxu0 0.0
  %127 = vmatmul.mubr.f32.gmra.mrb[0].mxu0 %v39
  %v128 = vpop.f32.mrb[0].mxu0
  %v129 = vadd.f32 0.0, %v128
  %v130 = vpop.f32.mrb[0].mxu0
  %131 = vmatprep.mubr.f32.mxu0 0.0
  %132 = vmatmul.mubr.f32.gmra.mrb[0].mxu0 %v42
  %v133 = vpop.f32.mrb[0].mxu0
  %v134 = vadd.f32 0.0, %v133
  %v135 = vpop.f32.mrb[0].mxu0
  %136 = vmatprep.mubr.f32.mxu0 0.0
  %137 = vmatmul.mubr.f32.gmra.mrb[0].mxu0 %v45
  %v138 = vpop.f32.mrb[0].mxu0
  %v139 = vadd.f32 0.0, %v138
  %v140 = vpop.f32.mrb[0].mxu0
  %141 = vdwg.mxu0
  %v142 = vld [vmem:[%s3] sm:$0xff]
  %v143 = vld [vmem:[%s3 + $0x8] sm:$0xff]
  %v144 = vld [vmem:[%s3 + $0x10] sm:$0xff]
  %v145 = vld [vmem:[%s3 + $0x18] sm:$0xff]
  %v146 = vld [vmem:[%s3 + $0x20] sm:$0xff]
  %v147 = vld [vmem:[%s3 + $0x28] sm:$0xff]
  %v148 = vmul.f32 %v114, %v142
  %v149 = vmul.f32 %v119, %v143
  %v150 = vmul.f32 %v124, %v144
  %v151 = vmul.f32 %v129, %v145
  %v152 = vmul.f32 %v134, %v146
  %v153 = vmul.f32 %v139, %v147
  %v154 = vld [vmem:[%s0] sm:$0xf]
  %v155 = vld [vmem:[%s4] sm:$0x1]
  %v157 = vlaneseq
  %v158 = vshrl.u32 %v157, 7
  %v159 = vsub.s32 0, %v158
  %v160 = vrot.slane %v155, %v159
  %vm162 = vcmask 392192
  %v164 = vsel %vm162, %v154, 0
  %166 = vmatprep.subr.mxu0 0.0
  %167 = vmatpush1.msra.mxu0 %v148
  %168 = vmatprep.subr.mxu0 0.0
  %169 = vmatpush1.msra.mxu0 %v149
  %170 = vmatprep.subr.mxu0 0.0
  %171 = vmatpush1.msra.mxu0 %v150
  %172 = vmatprep.subr.mxu0 0.0
  %173 = vmatpush1.msra.mxu0 %v151
  %174 = vmatprep.subr.mxu0 0.0
  %175 = vmatpush1.msra.mxu0 %v152
  %176 = vmatprep.subr.mxu0 0.0
  %177 = vmatpush1.msra.mxu0 %v153
  %178 = vmatprep.subr.mxu0 0.0
  %179 = vmatpush1.msra.mxu0 0.0
  %180 = vmatprep.subr.mxu0 0.0
  %181 = vmatpush1.msra.mxu0 0.0
  %182 = vmatprep.subr.mxu0 0.0
  %183 = vmatpush1.msra.mxu0 0.0
  %184 = vmatprep.subr.mxu0 0.0
  %185 = vmatpush1.msra.mxu0 0.0
  %186 = vmatprep.subr.mxu0 0.0
  %187 = vmatpush1.msra.mxu0 0.0
  %188 = vmatprep.subr.mxu0 0.0
  %189 = vmatpush1.msra.mxu0 0.0
  %190 = vmatprep.subr.mxu0 0.0
  %191 = vmatpush1.msra.mxu0 0.0
  %192 = vmatprep.subr.mxu0 0.0
  %193 = vmatpush1.msra.mxu0 0.0
  %194 = vmatprep.subr.mxu0 0.0
  %195 = vmatpush1.msra.mxu0 0.0
  %196 = vmatprep.subr.mxu0 0.0
  %197 = vmatpush1.msra.mxu0 0.0
  %198 = vmatprep.subr.mxu0 0.0
  %199 = vmatpush1.msra.mxu0 0.0
  %200 = vmatprep.subr.mxu0 0.0
  %201 = vmatpush1.msra.mxu0 0.0
  %202 = vmatprep.subr.mxu0 0.0
  %203 = vmatpush1.msra.mxu0 0.0
  %204 = vmatprep.subr.mxu0 0.0
  %205 = vmatpush1.msra.mxu0 0.0
  %206 = vmatprep.subr.mxu0 0.0
  %207 = vmatpush1.msra.mxu0 0.0
  %208 = vmatprep.subr.mxu0 0.0
  %209 = vmatpush1.msra.mxu0 0.0
  %210 = vmatprep.subr.mxu0 0.0
  %211 = vmatpush1.msra.mxu0 0.0
  %212 = vmatprep.subr.mxu0 0.0
  %213 = vmatpush1.msra.mxu0 0.0
  %214 = vmatprep.subr.mxu0 0.0
  %215 = vmatpush1.msra.mxu0 0.0
  %216 = vmatprep.subr.mxu0 0.0
  %217 = vmatpush1.msra.mxu0 0.0
  %218 = vmatprep.subr.mxu0 0.0
  %219 = vmatpush1.msra.mxu0 0.0
  %220 = vmatprep.subr.mxu0 0.0
  %221 = vmatpush1.msra.mxu0 0.0
  %222 = vmatprep.subr.mxu0 0.0
  %223 = vmatpush1.msra.mxu0 0.0
  %224 = vmatprep.subr.mxu0 0.0
  %225 = vmatpush1.msra.mxu0 0.0
  %226 = vmatprep.subr.mxu0 0.0
  %227 = vmatpush1.msra.mxu0 0.0
  %228 = vmatprep.subr.mxu0 0.0
  %229 = vmatpush1.msra.mxu0 0.0
  %230 = vmatprep.mubr.f32.mxu0 0.0
  %231 = vmatmul.mubr.f32.gmra.mrb[0].mxu0 %v164
  %v232 = vpop.f32.mrb[0].mxu0
  %v233 = vadd.f32 %v160, %v232
  %v234 = vpop.f32.mrb[0].mxu0
  %235 = vdwg.mxu0
  %vm236 = vcmask 781312
  %237 = vst.msk [vmem:[%s5] sm:$0xf] %vm236, %v233
  // Predicated region
  $region22: #{multilinear_parallel.1} parent=0 // pred_check
    _
  $region23: #{multilinear_parallel.1} parent=0 // pred_check_branch
    %239 = sbr.rel (0) target = $region25
  $region24: #{multilinear_parallel.1} parent=0 // pred_region
    _
  $region25: #{multilinear_parallel.1} parent=0 // pred_fallthru
    _
  // Predicated region
  $region26: #{multilinear_parallel.1} parent=0 // pred_check
    _
  $region27: #{multilinear_parallel.1} parent=0 // pred_check_branch
    %241 = sbr.rel (0) target = $region29
  $region28: #{multilinear_parallel.1} parent=0 // pred_region
    _
  $region29: #{multilinear_parallel.1} parent=0 // pred_fallthru
    _

</llo_original>
